<compile_context>
chip_gen: v6e
topology: v6e:2x2x1
jax: 0.10.0
libtpu: 0.0.40
codegen_flags: <defaults>
</compile_context>

<pallas_src>
import functools
import math

import numpy as np
import jax
import jax.numpy as jnp
from jax.experimental import pallas as pl
from jax.experimental.pallas import tpu as pltpu


def _round_up(x: int, m: int) -> int:
    return ((x + m - 1) // m) * m


# ----------------------------- Pallas kernel ----------------------------------------
def _finetuning_head_kernel(x_ref, w_ref, b_ref, o_ref, *, apply_sigmoid):
    x = x_ref[...]                                            # (TM, H)  x dtype
    w = w_ref[...]                                            # (H, OP)  x dtype
    # MXU matmul with f32 accumulation; epilogue stays in f32.
    y = jnp.dot(x, w, preferred_element_type=jnp.float32)     # (TM, OP) f32
    y = y + b_ref[...]                                        # bias broadcast (1, OP)
    if apply_sigmoid:
        # Numerically stable logistic: exp argument is always <= 0 (no overflow).
        e = jnp.exp(-jnp.abs(y))                              # EUP
        inv = 1.0 / (1.0 + e)
        y = jnp.where(y >= 0, inv, e * inv)
    o_ref[...] = y.astype(o_ref.dtype)


# ----------------------------- wrapper -----------------------------------------------
def finetuning_head_forward(params, x, *, num_outputs, regression, block_m=512):
    """JAX/Pallas equivalent of FinetuningHead.forward.

    params: {"w": (hidden_size, num_outputs)  (== torch weight transposed),
             "b": (num_outputs,)}
    x:      (..., hidden_size) array (f32 or bf16).
    returns (..., num_outputs) in x.dtype
    """
    w = params["w"]
    b = params["b"]
    H, O = w.shape
    assert x.shape[-1] == H, (x.shape, H)
    assert O == num_outputs

    lead = x.shape[:-1]
    M = int(np.prod(lead)) if lead else 1
    x2 = x.reshape(M, H)                      # keep original dtype (no forced f32 cast)

    # Lane-dense output: pad num_outputs up to a multiple of 128.
    OP = _round_up(max(O, 128), 128)
    # Tile M: TM multiple of 8, capped; pad M so every tile is full.
    TM = min(block_m, _round_up(M, 8))
    MP = _round_up(M, TM)
    if MP != M:
        x2 = jnp.pad(x2, ((0, MP - M), (0, 0)))

    # Weight in the activation dtype (matched MXU operands); bias stays f32 (epilogue).
    w_p = jnp.zeros((H, OP), dtype=x2.dtype).at[:, :O].set(w.astype(x2.dtype))
    b_p = jnp.zeros((1, OP), dtype=jnp.float32).at[0, :O].set(b.astype(jnp.float32))

    apply_sigmoid = (not regression) and (num_outputs == 1)
    kernel = functools.partial(_finetuning_head_kernel, apply_sigmoid=apply_sigmoid)

    itemsize = jnp.dtype(x2.dtype).itemsize
    cost = pl.CostEstimate(
        flops=2 * MP * H * OP,
        transcendentals=(MP * OP) if apply_sigmoid else 0,
        bytes_accessed=(MP * H + H * OP) * itemsize + OP * 4 + MP * OP * itemsize,
    )

    out = pl.pallas_call(
        kernel,
        out_shape=jax.ShapeDtypeStruct((MP, OP), x2.dtype),
        grid=(MP // TM,),
        in_specs=[
            pl.BlockSpec((TM, H), lambda i: (i, 0)),   # activations, pipelined over M
            pl.BlockSpec((H, OP), lambda i: (0, 0)),   # weight, VMEM-resident
            pl.BlockSpec((1, OP), lambda i: (0, 0)),   # bias (lane-dense), resident
        ],
        out_specs=pl.BlockSpec((TM, OP), lambda i: (i, 0)),
        compiler_params=pltpu.CompilerParams(
            dimension_semantics=("parallel",),         # 2x on v7x megacore
        ),
        cost_estimate=cost,
    )(x2, w_p, b_p)

    return out[:M, :O].reshape(*lead, O)


# ----------------------------- main ---------------------------------------------------
if __name__ == "__main__":
    key = jax.random.PRNGKey(0)
    k_w1, k_b1, k_w2, k_b2, k_x = jax.random.split(key, 5)

    B, T, HIDDEN = 2, 8, 32                     # small shapes consistent with the module
    lim = 1.0 / math.sqrt(HIDDEN)               # nn.Linear default init bound

    # Classification head: num_outputs == 1 and regression=False -> sigmoid applied.
    n_out_cls = 1
    params_cls = dict(
        w=jax.random.uniform(k_w1, (HIDDEN, n_out_cls), jnp.float32, -lim, lim),
        b=jax.random.uniform(k_b1, (n_out_cls,), jnp.float32, -lim, lim),
    )
    # Regression head: regression=True (num_outputs=4) -> plain linear.
    n_out_reg = 4
    params_reg = dict(
        w=jax.random.uniform(k_w2, (HIDDEN, n_out_reg), jnp.float32, -lim, lim),
        b=jax.random.uniform(k_b2, (n_out_reg,), jnp.float32, -lim, lim),
    )

    x = jax.random.normal(k_x, (B, T, HIDDEN), jnp.float32)

    # f32 paths (validated tightly against the pure-JAX / torch-equivalent reference).
    out_cls = jax.block_until_ready(
        finetuning_head_forward(params_cls, x, num_outputs=n_out_cls, regression=False))
    out_reg = jax.block_until_ready(
        finetuning_head_forward(params_reg, x, num_outputs=n_out_reg, regression=True))

    assert out_cls.shape == (B, T, n_out_cls), out_cls.shape
    assert out_reg.shape == (B, T, n_out_reg), out_reg.shape

    ref_cls = jax.nn.sigmoid(x @ params_cls["w"] + params_cls["b"])
    ref_reg = x @ params_reg["w"] + params_reg["b"]
    assert jnp.allclose(out_cls, ref_cls, rtol=1e-5, atol=1e-5)
    assert jnp.allclose(out_reg, ref_reg, rtol=1e-5, atol=1e-5)
    assert bool(jnp.all(jnp.isfinite(out_cls))) and bool(jnp.all(jnp.isfinite(out_reg)))

    # bf16 activation path: MXU gets native bf16 operands, f32 accumulation/epilogue.
    x_bf16 = x.astype(jnp.bfloat16)
    out_bf16 = jax.block_until_ready(
        finetuning_head_forward(params_cls, x_bf16, num_outputs=n_out_cls,
                                regression=False))
    assert out_bf16.shape == (B, T, n_out_cls)
    assert jnp.allclose(out_bf16.astype(jnp.float32), ref_cls, rtol=3e-2, atol=3e-2)

    print("KERNEL_OK")
</pallas_src>

<mosaic_0001>
module attributes {stable_mosaic.version = 11 : i64} {
  func.func @_finetuning_head_kernel(%arg0: i32, %arg1: memref<16x32xf32, #tpu.memory_space<vmem>>, %arg2: memref<32x128xf32, #tpu.memory_space<vmem>>, %arg3: memref<1x128xf32, #tpu.memory_space<vmem>>, %arg4: memref<16x128xf32, #tpu.memory_space<vmem>>) attributes {dimension_semantics = [#tpu.dimension_semantics<parallel>], iteration_bounds = array<i64: 1>, scalar_prefetch = 0 : i64, scratch_operands = 0 : i64, tpu.core_type = #tpu.core_type<tc>, window_params = [{transform_indices = @transform_0, window_bounds = array<i64: 16, 32>}, {pipeline_mode = #tpu.pipeline_mode<synchronous>, transform_indices = @transform_1, window_bounds = array<i64: 32, 128>}, {pipeline_mode = #tpu.pipeline_mode<synchronous>, transform_indices = @transform_2, window_bounds = array<i64: 1, 128>}, {transform_indices = @transform_3, window_bounds = array<i64: 16, 128>}]} {
    %c0 = arith.constant 0 : index
    %c0_0 = arith.constant 0 : index
    %0 = vector.load %arg1[%c0, %c0_0] : memref<16x32xf32, #tpu.memory_space<vmem>>, vector<16x32xf32>
    %c0_1 = arith.constant 0 : index
    %c0_2 = arith.constant 0 : index
    %1 = vector.load %arg2[%c0_1, %c0_2] : memref<32x128xf32, #tpu.memory_space<vmem>>, vector<32x128xf32>
    %cst = arith.constant dense<0.000000e+00> : vector<16x128xf32>
    %2 = tpu.matmul %0, %1, %cst {dimension_numbers = #tpu.dot_dimension_numbers<[1], [0], [0], [1], [0, 0, 1, 1], [], []>} : vector<16x32xf32>, vector<32x128xf32>, vector<16x128xf32> -> vector<16x128xf32>
    %c0_3 = arith.constant 0 : index
    %c0_4 = arith.constant 0 : index
    %3 = vector.load %arg3[%c0_3, %c0_4] : memref<1x128xf32, #tpu.memory_space<vmem>>, vector<1x128xf32>
    %4 = vector.broadcast %3 : vector<1x128xf32> to vector<16x128xf32>
    %5 = arith.addf %2, %4 : vector<16x128xf32>
    %6 = math.absf %5 : vector<16x128xf32>
    %cst_5 = arith.constant 0.000000e+00 : f32
    %7 = vector.broadcast %cst_5 : f32 to vector<16x128xf32>
    %8 = arith.subf %7, %6 : vector<16x128xf32>
    %9 = math.exp %8 : vector<16x128xf32>
    %cst_6 = arith.constant 1.000000e+00 : f32
    %10 = vector.broadcast %cst_6 : f32 to vector<16x128xf32>
    %11 = arith.addf %10, %9 : vector<16x128xf32>
    %cst_7 = arith.constant 1.000000e+00 : f32
    %12 = vector.broadcast %cst_7 : f32 to vector<16x128xf32>
    %13 = arith.divf %12, %11 : vector<16x128xf32>
    %cst_8 = arith.constant 0.000000e+00 : f32
    %14 = vector.broadcast %cst_8 : f32 to vector<16x128xf32>
    %15 = arith.cmpf oge, %5, %14 : vector<16x128xf32>
    %16 = arith.mulf %9, %13 : vector<16x128xf32>
    %17 = arith.select %15, %13, %16 : vector<16x128xi1>, vector<16x128xf32>
    %c0_9 = arith.constant 0 : index
    %c0_10 = arith.constant 0 : index
    %18 = vector.load %arg4[%c0_9, %c0_10] : memref<16x128xf32, #tpu.memory_space<vmem>>, vector<16x128xf32>
    tpu.vector_store %arg4[%c0_9, %c0_10], %17 {strides = array<i32>} : memref<16x128xf32, #tpu.memory_space<vmem>>, vector<16x128xf32>,
    return
  }
  func.func @transform_0(%arg0: i32) -> (i32, i32) {
    %c0_i32 = arith.constant 0 : i32
    %c0_i32_0 = arith.constant 0 : i32
    return %arg0, %c0_i32 : i32, i32
  }
  func.func @transform_1(%arg0: i32) -> (i32, i32) {
    %c0_i32 = arith.constant 0 : i32
    %c0_i32_0 = arith.constant 0 : i32
    %c0_i32_1 = arith.constant 0 : i32
    return %c0_i32, %c0_i32_0 : i32, i32
  }
  func.func @transform_2(%arg0: i32) -> (i32, i32) {
    %c0_i32 = arith.constant 0 : i32
    %c0_i32_0 = arith.constant 0 : i32
    %c0_i32_1 = arith.constant 0 : i32
    return %c0_i32, %c0_i32_0 : i32, i32
  }
  func.func @transform_3(%arg0: i32) -> (i32, i32) {
    %c0_i32 = arith.constant 0 : i32
    %c0_i32_0 = arith.constant 0 : i32
    return %arg0, %c0_i32 : i32, i32
  }
}

</mosaic_0001>

<llo_original>
// kernel: tpu_custom_call.1
$region0: #{tpu_custom_call.1}
  #allocation0 [shape = 'u32[]', space=smem, size = 0x4, offset = 0x4, fixed_abs, tag = 'smem constant byte address 0x4 - core index']
  #allocation1 [shape = 'u32[144,128]{1,0:T(1,128)}', space=vmem, size = 0x12000, scoped, tag = 'internal scratch']
  %s0 = inlined_call_operand.hbm [shape: f32[16,32], index: 0, kind: input, shape index: {}]
  %s1 = inlined_call_operand.hbm [shape: f32[32,128], index: 1, kind: input, shape index: {}]
  %s2 = inlined_call_operand.vmem [shape: f32[1,128], index: 2, kind: input, shape index: {}]
  %s3 = inlined_call_operand.hbm [shape: f32[16,128], index: 3, kind: output, shape index: {}]
  %s4 = sld [smem:[#allocation0]]
  $region30: #{tpu_custom_call.1} parent=0
    _
  %s6 = ssub.s32 1, %s4
  %s7 = scalar_select 0, %s6, %s4
  $region1: #{tpu_custom_call.1} parent=0
    #allocation2 [shape = 'u8[8192]{0}', space=vmem, size = 0x2000, scoped, tag = 'input window, operand 0, single buffered']
    #allocation3 [shape = 's32[1]{0}', space=sflag, size = 0x4, scoped, tag = 'scoped memory for tpu_custom_call.1']
    #allocation4 [shape = 's32[1]{0}', space=sflag, size = 0x4, scoped, tag = 'scoped memory for tpu_custom_call.1']
    #allocation5 [shape = 'u8[16384]{0}', space=vmem, size = 0x4000, scoped, tag = 'input window, operand 1, single buffered']
    #allocation6 [shape = 's32[1]{0}', space=sflag, size = 0x4, scoped, tag = 'scoped memory for tpu_custom_call.1']
    #allocation7 [shape = 'u8[8192]{0}', space=vmem, size = 0x2000, scoped, tag = 'output window, operand 0, single buffered']
    %8 = vsyncpa [#allocation3], 0
    %9 = vsyncpa [#allocation6], 0
    %10 = vsyncpa [#allocation4], 0
    // Predicated region
    $region2: #{tpu_custom_call.1} parent=1 // pred_check
      _
    $region3: #{tpu_custom_call.1} parent=1 // pred_check_branch
      %12 = sbr.rel (0) target = $region5
    $region4: #{tpu_custom_call.1} parent=1 // pred_region
      %s14 = ssub.s32 256, 256
      %15 = vsyncadd [#allocation3], %s14
      %s16 = sshll.u32 [#allocation2], 4
      %s17 = int_to_ptr.vmem [resolvable:$true] %s16
      %22 = dma.hbm_to_vmem [thread:$0]  %s0, 256, %s17, [#allocation3], 128, 128, 8
    $region5: #{tpu_custom_call.1} parent=1 // pred_fallthru
      _
    // Predicated region
    $region6: #{tpu_custom_call.1} parent=1 // pred_check
      _
    $region7: #{tpu_custom_call.1} parent=1 // pred_check_branch
      %24 = sbr.rel (0) target = $region9
    $region8: #{tpu_custom_call.1} parent=1 // pred_region
      %s26 = ssub.s32 512, 512
      %27 = vsyncadd [#allocation6], %s26
      %s28 = sshll.u32 [#allocation5], 4
      %s29 = int_to_ptr.vmem [resolvable:$true] %s28
      %34 = dma.hbm_to_vmem [thread:$0]  %s1, 512, %s29, [#allocation6], 128, 128, 8
    $region9: #{tpu_custom_call.1} parent=1 // pred_fallthru
      _
    // Predicated region
    $region10: #{tpu_custom_call.1} parent=1 // pred_check
      _
    $region11: #{tpu_custom_call.1} parent=1 // pred_check_branch
      %36 = sbr.rel (0) target = $region13
    $region12: #{tpu_custom_call.1} parent=1 // pred_region
      _
    $region13: #{tpu_custom_call.1} parent=1 // pred_fallthru
      _
    // Predicated region
    $region14: #{tpu_custom_call.1} parent=1 // pred_check
      _
    $region15: #{tpu_custom_call.1} parent=1 // pred_check_branch
      %38 = sbr.rel (0) target = $region17
    $region16: #{tpu_custom_call.1} parent=1 // pred_region
      %39 = dma.done [#allocation3], 256
    $region17: #{tpu_custom_call.1} parent=1 // pred_fallthru
      _
    // Predicated region
    $region18: #{tpu_custom_call.1} parent=1 // pred_check
      _
    $region19: #{tpu_custom_call.1} parent=1 // pred_check_branch
      %41 = sbr.rel (0) target = $region21
    $region20: #{tpu_custom_call.1} parent=1 // pred_region
      %42 = dma.done [#allocation6], 512
    $region21: #{tpu_custom_call.1} parent=1 // pred_fallthru
      _
    %v43 = vld [vmem:[#allocation2] sm:$0xff]
    %v44 = vld [vmem:[#allocation2 + $0x8] sm:$0xff]
    %v45 = vld [vmem:[#allocation5] sm:$0xff]
    %v46 = vld [vmem:[#allocation5 + $0x8] sm:$0xff]
    %v47 = vld [vmem:[#allocation5 + $0x10] sm:$0xff]
    %v48 = vld [vmem:[#allocation5 + $0x18] sm:$0xff]
    %v49 = vld [vmem:[%s2] sm:$0x1]
    %v51 = vlaneseq
    %v52 = vshrl.u32 %v51, 7
    %v53 = vsub.s32 0, %v52
    %v54 = vrot.slane %v49, %v53
    %vm56 = vcmask 261120
    %v58 = vsel %vm56, %v43, 0
    %v61 = vsel %vm56, %v44, 0
    %63 = vmatprep.subr.mxu0 0.0
    %64 = vmatpush1.msra.mxu0 0.0
    %65 = vmatprep.subr.mxu0 0.0
    %66 = vmatpush1.msra.mxu0 0.0
    %67 = vmatprep.subr.mxu0 0.0
    %68 = vmatpush1.msra.mxu0 0.0
    %69 = vmatprep.subr.mxu0 0.0
    %70 = vmatpush1.msra.mxu0 0.0
    %71 = vmatprep.subr.mxu0 0.0
    %72 = vmatpush1.msra.mxu0 0.0
    %73 = vmatprep.subr.mxu0 0.0
    %74 = vmatpush1.msra.mxu0 0.0
    %75 = vmatprep.subr.mxu0 0.0
    %76 = vmatpush1.msra.mxu0 0.0
    %77 = vmatprep.subr.mxu0 0.0
    %78 = vmatpush1.msra.mxu0 0.0
    %79 = vmatprep.subr.mxu0 0.0
    %80 = vmatpush1.msra.mxu0 0.0
    %81 = vmatprep.subr.mxu0 0.0
    %82 = vmatpush1.msra.mxu0 0.0
    %83 = vmatprep.subr.mxu0 0.0
    %84 = vmatpush1.msra.mxu0 0.0
    %85 = vmatprep.subr.mxu0 0.0
    %86 = vmatpush1.msra.mxu0 0.0
    %87 = vmatprep.subr.mxu0 0.0
    %88 = vmatpush1.msra.mxu0 %v48
    %89 = vmatprep.subr.mxu0 0.0
    %90 = vmatpush1.msra.mxu0 %v47
    %91 = vmatprep.subr.mxu0 0.0
    %92 = vmatpush1.msra.mxu0 %v46
    %93 = vmatprep.subr.mxu0 0.0
    %94 = vmatpush1.msra.mxu0 %v45
    %95 = vmatprep.subr.mxu0 0.0
    %96 = vmatpush2.msra.mxu0 0.0
    %97 = vmatprep.subr.mxu0 0.0
    %98 = vmatpush2.msra.mxu0 0.0
    %99 = vmatprep.subr.mxu0 0.0
    %100 = vmatpush2.msra.mxu0 0.0
    %101 = vmatprep.subr.mxu0 0.0
    %102 = vmatpush2.msra.mxu0 0.0
    %103 = vmatprep.subr.mxu0 0.0
    %104 = vmatpush2.msra.mxu0 0.0
    %105 = vmatprep.subr.mxu0 0.0
    %106 = vmatpush2.msra.mxu0 0.0
    %107 = vmatprep.subr.mxu0 0.0
    %108 = vmatpush2.msra.mxu0 0.0
    %109 = vmatprep.subr.mxu0 0.0
    %110 = vmatpush2.msra.mxu0 0.0
    %111 = vmatprep.subr.mxu0 0.0
    %112 = vmatpush2.msra.mxu0 0.0
    %113 = vmatprep.subr.mxu0 0.0
    %114 = vmatpush2.msra.mxu0 0.0
    %115 = vmatprep.subr.mxu0 0.0
    %116 = vmatpush2.msra.mxu0 0.0
    %117 = vmatprep.subr.mxu0 0.0
    %118 = vmatpush2.msra.mxu0 0.0
    %119 = vmatprep.subr.mxu0 0.0
    %120 = vmatpush2.msra.mxu0 0.0
    %121 = vmatprep.subr.mxu0 0.0
    %122 = vmatpush2.msra.mxu0 0.0
    %123 = vmatprep.subr.mxu0 0.0
    %124 = vmatpush2.msra.mxu0 0.0
    %125 = vmatprep.subr.mxu0 0.0
    %126 = vmatpush2.msra.mxu0 0.0
    %127 = vmatprep.mubr.f32.mxu0 0.0
    %128 = vmatmul.mubr.f32.gmra.mxu0 %v58
    %v129 = vpop.f32.mrf.mxu0
    %v130 = vadd.f32 %v54, %v129
    %v131 = vpop.f32.mrf.mxu0
    %132 = vmatprep.mubr.f32.mxu0 0.0
    %133 = vmatmul.mubr.f32.gmra.mxu0 %v61
    %v134 = vpop.f32.mrf.mxu0
    %v135 = vadd.f32 %v54, %v134
    %v136 = vpop.f32.mrf.mxu0
    %137 = vdwg.mxu0
    %v138 = vand.u32 2147483647, %v130
    %v139 = vand.u32 2147483647, %v135
    %v140 = vsub.f32 0.0, %v138
    %v141 = vsub.f32 0.0, %v139
    %v142 = vmul.f32 %v140, 1.442695
    %v143 = vpow.pop %v142
    %v144 = vmul.f32 %v141, 1.442695
    %v145 = vpow.pop %v144
    %v146 = vadd.f32 %v143, 1.0
    %v147 = vadd.f32 %v145, 1.0
    %v148 = vrcp.pop %v146
    %v149 = vmul.f32 1.0, %v148
    %v150 = vrcp.pop %v147
    %v151 = vmul.f32 1.0, %v150
    %vm152 = vcmp.ge.f32.partialorder %v130, 0.0
    %vm153 = vcmp.ge.f32.partialorder %v135, 0.0
    %v154 = vmul.f32 %v143, %v149
    %v155 = vmul.f32 %v145, %v151
    %v156 = vsel %vm152, %v149, %v154
    %v157 = vsel %vm153, %v151, %v155
    %158 = vst [vmem:[#allocation7] sm:$0xff] %v156
    %159 = vst [vmem:[#allocation7 + $0x8] sm:$0xff] %v157
    // Predicated region
    $region22: #{tpu_custom_call.1} parent=1 // pred_check
      _
    $region23: #{tpu_custom_call.1} parent=1 // pred_check_branch
      %161 = sbr.rel (0) target = $region25
    $region24: #{tpu_custom_call.1} parent=1 // pred_region
      %s163 = ssub.s32 256, 256
      %164 = vsyncadd [#allocation4], %s163
      %s165 = sshll.u32 [#allocation7], 4
      %s166 = int_to_ptr.vmem [resolvable:$true] %s165
      %171 = dma.vmem_to_hbm [thread:$0]  %s166, 256, %s3, [#allocation4], 128, 128, 8
    $region25: #{tpu_custom_call.1} parent=1 // pred_fallthru
      _
    // Predicated region
    $region26: #{tpu_custom_call.1} parent=1 // pred_check
      _
    $region27: #{tpu_custom_call.1} parent=1 // pred_check_branch
      %173 = sbr.rel (0) target = $region29
    $region28: #{tpu_custom_call.1} parent=1 // pred_region
      %174 = dma.done [#allocation4], 256
    $region29: #{tpu_custom_call.1} parent=1 // pred_fallthru
      _
    %175 = vsyncpa [#allocation3], 1
    %176 = vsyncpa [#allocation6], 1
    %177 = vsyncpa [#allocation4], 1

</llo_original>
